<compile_context>
chip_gen: v7x
topology: tpu7x:2x2x1
jax: 0.10.0
libtpu: 0.0.40
codegen_flags: <defaults>
</compile_context>

<pallas_src>
import functools

import jax
import jax.numpy as jnp
from jax.experimental import pallas as pl
from jax.experimental.pallas import tpu as pltpu


def critic_mlp_kernel(s_ref, a_ref, w1s_ref, w1a_ref, b1_ref,
                      w2_ref, b2_ref, w3_ref, b3_ref, o_ref, *, operand_dtype):
    """Fused 3-layer MLP forward for one batch tile.

    s_ref  : [TB, S]      a_ref  : [TB, A]
    w1s_ref: [S, H]       w1a_ref: [A, H]      b1_ref: [1, H]
    w2_ref : [H, H]       b2_ref : [1, H]
    w3_ref : [1, H] (transposed, O == 1)  or  [H, O]
    b3_ref : [1, O]       o_ref  : [TB, O]
    """
    s = s_ref[...]
    a = a_ref[...]

    # Layer 1: fused-concat Linear + ReLU  (s @ W1_s + a @ W1_a + b1)
    h1 = (jnp.dot(s, w1s_ref[...], preferred_element_type=jnp.float32)
          + jnp.dot(a, w1a_ref[...], preferred_element_type=jnp.float32)
          + b1_ref[...])
    h1 = jnp.maximum(h1, 0.0)                       # f32 elementwise (v5e-safe)

    # Layer 2: Linear + ReLU (operands optionally bf16, accumulate f32)
    h2 = jnp.dot(h1.astype(operand_dtype), w2_ref[...],
                 preferred_element_type=jnp.float32) + b2_ref[...]
    h2 = jnp.maximum(h2, 0.0)

    # Layer 3
    if o_ref.shape[-1] == 1 and w3_ref.shape[0] == 1:
        # O == 1: per-lane multiply + cross-lane reduce (VPU/XLU); an MXU
        # matmul would waste a 128/256-wide pass on a single useful column.
        q = (jnp.sum(h2 * w3_ref[...].astype(jnp.float32), axis=-1,
                     keepdims=True) + b3_ref[...])
    else:
        q = jnp.dot(h2.astype(operand_dtype), w3_ref[...],
                    preferred_element_type=jnp.float32) + b3_ref[...]

    o_ref[...] = q.astype(o_ref.dtype)


def critic_forward(state, action, params, *, block_batch=512, matmul_dtype=None):
    """JAX wrapper: concat fused into the kernel, batch tiled on a 1-D grid.

    params = (w1, b1, w2, b2, w3, b3); weights [in, out], biases [1, out].
    matmul_dtype: optionally jnp.bfloat16 to feed the MXU bf16 operands on
                  v6e/v7x (accumulation / bias / ReLU stay f32).
    """
    w1, b1, w2, b2, w3, b3 = params
    B, S = state.shape
    A = action.shape[1]
    H = w1.shape[1]
    O = w3.shape[1]
    assert w1.shape[0] == S + A

    operand_dtype = jnp.dtype(matmul_dtype) if matmul_dtype is not None else jnp.float32

    # Split W1 so the concat is fused into layer 1 (no HBM round-trip of x).
    w1_s, w1_a = w1[:S], w1[S:]
    # O == 1: pass W3 transposed ([1, H]) -> kernel does a VPU/XLU reduction.
    w3_k = w3.T if O == 1 else w3

    cast = lambda t: t.astype(operand_dtype)
    state_k, action_k = cast(state), cast(action)
    w1_s, w1_a, w2_k, w3_k = cast(w1_s), cast(w1_a), cast(w2), cast(w3_k)

    # Batch tile: whole batch if small, else 512-row tiles (multiple of 8).
    if B <= block_batch:
        tb = B
    else:
        tb = max(8, (block_batch // 8) * 8)
    grid = (pl.cdiv(B, tb),)

    batch_spec = lambda feat: pl.BlockSpec((tb, feat), lambda i: (i, 0))
    # Same block index every grid step -> operand stays resident in VMEM.
    resident = lambda shape: pl.BlockSpec(shape, lambda i: (0, 0))

    itemsize = jnp.dtype(operand_dtype).itemsize
    flops = 2 * B * ((S + A) * H + H * H + H * O)
    bytes_accessed = (itemsize * (B * (S + A) + (S + A) * H + H * H + H * O)
                      + 4 * (2 * H + O)     # biases (f32)
                      + 4 * B * O)          # output (f32)
    cost = pl.CostEstimate(flops=flops, transcendentals=0,
                           bytes_accessed=bytes_accessed)

    kernel = functools.partial(critic_mlp_kernel, operand_dtype=operand_dtype)

    return pl.pallas_call(
        kernel,
        out_shape=jax.ShapeDtypeStruct((B, O), jnp.float32),
        grid=grid,
        in_specs=[
            batch_spec(S),            # state tile
            batch_spec(A),            # action tile
            resident(w1_s.shape),
            resident(w1_a.shape),
            resident(b1.shape),
            resident(w2_k.shape),
            resident(b2.shape),
            resident(w3_k.shape),
            resident(b3.shape),
        ],
        out_specs=pl.BlockSpec((tb, O), lambda i: (i, 0)),
        compiler_params=pltpu.CompilerParams(
            dimension_semantics=("parallel",)),
        cost_estimate=cost,
    )(state_k, action_k, w1_s, w1_a, b1, w2_k, b2, w3_k, b3)


def init_critic_params(key, input_size, hidden_size, output_size):
    """Mirror torch.nn.Linear default init U(-1/sqrt(fan_in), 1/sqrt(fan_in)).

    Weights stored [in_features, out_features]; biases [1, out_features].
    """
    def linear(k, fan_in, fan_out):
        kw, kb = jax.random.split(k)
        bound = 1.0 / jnp.sqrt(float(fan_in))
        w = jax.random.uniform(kw, (fan_in, fan_out), jnp.float32, -bound, bound)
        b = jax.random.uniform(kb, (1, fan_out), jnp.float32, -bound, bound)
        return w, b

    k1, k2, k3 = jax.random.split(key, 3)
    w1, b1 = linear(k1, input_size, hidden_size)
    w2, b2 = linear(k2, hidden_size, hidden_size)
    w3, b3 = linear(k3, hidden_size, output_size)
    return (w1, b1, w2, b2, w3, b3)


def critic_reference(state, action, params):
    """Pure-JAX reference for correctness checking."""
    w1, b1, w2, b2, w3, b3 = params
    x = jnp.concatenate([state, action], axis=1)
    x = jnp.maximum(x @ w1 + b1, 0.0)
    x = jnp.maximum(x @ w2 + b2, 0.0)
    return x @ w3 + b3


if __name__ == "__main__":
    # Small shapes consistent with a DDPG critic.
    batch = 2
    state_dim = 8
    action_dim = 4
    input_size = state_dim + action_dim   # 12
    hidden_size = 32
    output_size = 1

    key = jax.random.PRNGKey(0)
    k_params, k_state, k_action, k_state2, k_action2 = jax.random.split(key, 5)

    params = init_critic_params(k_params, input_size, hidden_size, output_size)
    state = jax.random.normal(k_state, (batch, state_dim), jnp.float32)
    action = jax.random.normal(k_action, (batch, action_dim), jnp.float32)

    q = jax.block_until_ready(critic_forward(state, action, params))
    q_ref = critic_reference(state, action, params)
    assert q.shape == (batch, output_size)
    assert jnp.allclose(q, q_ref, atol=1e-5, rtol=1e-5), (q, q_ref)

    # Exercise the tiled batch grid (weights stay VMEM-resident across tiles).
    big_batch = 1024
    state_b = jax.random.normal(k_state2, (big_batch, state_dim), jnp.float32)
    action_b = jax.random.normal(k_action2, (big_batch, action_dim), jnp.float32)
    q_b = jax.block_until_ready(critic_forward(state_b, action_b, params))
    q_b_ref = critic_reference(state_b, action_b, params)
    assert q_b.shape == (big_batch, output_size)
    assert jnp.allclose(q_b, q_b_ref, atol=1e-4, rtol=1e-4), "batched mismatch"

    print("KERNEL_OK")
</pallas_src>

<mosaic_0001>
module attributes {stable_mosaic.version = 11 : i64} {
  func.func @critic_mlp_kernel(%arg0: i32, %arg1: memref<2x8xf32, #tpu.memory_space<vmem>>, %arg2: memref<2x4xf32, #tpu.memory_space<vmem>>, %arg3: memref<8x32xf32, #tpu.memory_space<vmem>>, %arg4: memref<4x32xf32, #tpu.memory_space<vmem>>, %arg5: memref<1x32xf32, #tpu.memory_space<vmem>>, %arg6: memref<32x32xf32, #tpu.memory_space<vmem>>, %arg7: memref<1x32xf32, #tpu.memory_space<vmem>>, %arg8: memref<1x32xf32, #tpu.memory_space<vmem>>, %arg9: memref<1x1xf32, #tpu.memory_space<vmem>>, %arg10: memref<2x1xf32, #tpu.memory_space<vmem>>) attributes {dimension_semantics = [#tpu.dimension_semantics<parallel>], iteration_bounds = array<i64: 1>, scalar_prefetch = 0 : i64, scratch_operands = 0 : i64, tpu.core_type = #tpu.core_type<tc>, window_params = [{transform_indices = @transform_0, window_bounds = array<i64: 2, 8>}, {transform_indices = @transform_1, window_bounds = array<i64: 2, 4>}, {pipeline_mode = #tpu.pipeline_mode<synchronous>, transform_indices = @transform_2, window_bounds = array<i64: 8, 32>}, {pipeline_mode = #tpu.pipeline_mode<synchronous>, transform_indices = @transform_3, window_bounds = array<i64: 4, 32>}, {pipeline_mode = #tpu.pipeline_mode<synchronous>, transform_indices = @transform_4, window_bounds = array<i64: 1, 32>}, {pipeline_mode = #tpu.pipeline_mode<synchronous>, transform_indices = @transform_5, window_bounds = array<i64: 32, 32>}, {pipeline_mode = #tpu.pipeline_mode<synchronous>, transform_indices = @transform_6, window_bounds = array<i64: 1, 32>}, {pipeline_mode = #tpu.pipeline_mode<synchronous>, transform_indices = @transform_7, window_bounds = array<i64: 1, 32>}, {pipeline_mode = #tpu.pipeline_mode<synchronous>, transform_indices = @transform_8, window_bounds = array<i64: 1, 1>}, {transform_indices = @transform_9, window_bounds = array<i64: 2, 1>}]} {
    %c0 = arith.constant 0 : index
    %c0_0 = arith.constant 0 : index
    %0 = vector.load %arg1[%c0, %c0_0] : memref<2x8xf32, #tpu.memory_space<vmem>>, vector<2x8xf32>
    %c0_1 = arith.constant 0 : index
    %c0_2 = arith.constant 0 : index
    %1 = vector.load %arg2[%c0_1, %c0_2] : memref<2x4xf32, #tpu.memory_space<vmem>>, vector<2x4xf32>
    %c0_3 = arith.constant 0 : index
    %c0_4 = arith.constant 0 : index
    %2 = vector.load %arg3[%c0_3, %c0_4] : memref<8x32xf32, #tpu.memory_space<vmem>>, vector<8x32xf32>
    %cst = arith.constant dense<0.000000e+00> : vector<2x32xf32>
    %3 = tpu.matmul %0, %2, %cst {dimension_numbers = #tpu.dot_dimension_numbers<[1], [0], [0], [1], [0, 0, 1, 1], [], []>} : vector<2x8xf32>, vector<8x32xf32>, vector<2x32xf32> -> vector<2x32xf32>
    %c0_5 = arith.constant 0 : index
    %c0_6 = arith.constant 0 : index
    %4 = vector.load %arg4[%c0_5, %c0_6] : memref<4x32xf32, #tpu.memory_space<vmem>>, vector<4x32xf32>
    %cst_7 = arith.constant dense<0.000000e+00> : vector<2x32xf32>
    %5 = tpu.matmul %1, %4, %cst_7 {dimension_numbers = #tpu.dot_dimension_numbers<[1], [0], [0], [1], [0, 0, 1, 1], [], []>} : vector<2x4xf32>, vector<4x32xf32>, vector<2x32xf32> -> vector<2x32xf32>
    %6 = arith.addf %3, %5 : vector<2x32xf32>
    %c0_8 = arith.constant 0 : index
    %c0_9 = arith.constant 0 : index
    %7 = vector.load %arg5[%c0_8, %c0_9] : memref<1x32xf32, #tpu.memory_space<vmem>>, vector<1x32xf32>
    %8 = vector.broadcast %7 : vector<1x32xf32> to vector<2x32xf32>
    %9 = arith.addf %6, %8 : vector<2x32xf32>
    %cst_10 = arith.constant 0.000000e+00 : f32
    %10 = vector.broadcast %cst_10 : f32 to vector<2x32xf32>
    %11 = arith.maximumf %9, %10 : vector<2x32xf32>
    %c0_11 = arith.constant 0 : index
    %c0_12 = arith.constant 0 : index
    %12 = vector.load %arg6[%c0_11, %c0_12] : memref<32x32xf32, #tpu.memory_space<vmem>>, vector<32x32xf32>
    %cst_13 = arith.constant dense<0.000000e+00> : vector<2x32xf32>
    %13 = tpu.matmul %11, %12, %cst_13 {dimension_numbers = #tpu.dot_dimension_numbers<[1], [0], [0], [1], [0, 0, 1, 1], [], []>} : vector<2x32xf32>, vector<32x32xf32>, vector<2x32xf32> -> vector<2x32xf32>
    %c0_14 = arith.constant 0 : index
    %c0_15 = arith.constant 0 : index
    %14 = vector.load %arg7[%c0_14, %c0_15] : memref<1x32xf32, #tpu.memory_space<vmem>>, vector<1x32xf32>
    %15 = vector.broadcast %14 : vector<1x32xf32> to vector<2x32xf32>
    %16 = arith.addf %13, %15 : vector<2x32xf32>
    %cst_16 = arith.constant 0.000000e+00 : f32
    %17 = vector.broadcast %cst_16 : f32 to vector<2x32xf32>
    %18 = arith.maximumf %16, %17 : vector<2x32xf32>
    %c0_17 = arith.constant 0 : index
    %c0_18 = arith.constant 0 : index
    %19 = vector.load %arg8[%c0_17, %c0_18] : memref<1x32xf32, #tpu.memory_space<vmem>>, vector<1x32xf32>
    %20 = vector.broadcast %19 : vector<1x32xf32> to vector<2x32xf32>
    %21 = arith.mulf %18, %20 : vector<2x32xf32>
    %cst_19 = arith.constant dense<0.000000e+00> : vector<2xf32>
    %22 = vector.multi_reduction <add>, %21, %cst_19 [1] : vector<2x32xf32> to vector<2xf32>
    %23 = vector.shape_cast %22 : vector<2xf32> to vector<2x1xf32>
    %c0_20 = arith.constant 0 : index
    %c0_21 = arith.constant 0 : index
    %24 = vector.load %arg9[%c0_20, %c0_21] : memref<1x1xf32, #tpu.memory_space<vmem>>, vector<1x1xf32>
    %25 = vector.broadcast %24 : vector<1x1xf32> to vector<2x1xf32>
    %26 = arith.addf %23, %25 : vector<2x1xf32>
    %c0_22 = arith.constant 0 : index
    %c0_23 = arith.constant 0 : index
    %27 = vector.load %arg10[%c0_22, %c0_23] : memref<2x1xf32, #tpu.memory_space<vmem>>, vector<2x1xf32>
    tpu.vector_store %arg10[%c0_22, %c0_23], %26 {strides = array<i32>} : memref<2x1xf32, #tpu.memory_space<vmem>>, vector<2x1xf32>,
    return
  }
  func.func @transform_0(%arg0: i32) -> (i32, i32) {
    %c0_i32 = arith.constant 0 : i32
    %c0_i32_0 = arith.constant 0 : i32
    return %arg0, %c0_i32 : i32, i32
  }
  func.func @transform_1(%arg0: i32) -> (i32, i32) {
    %c0_i32 = arith.constant 0 : i32
    %c0_i32_0 = arith.constant 0 : i32
    return %arg0, %c0_i32 : i32, i32
  }
  func.func @transform_2(%arg0: i32) -> (i32, i32) {
    %c0_i32 = arith.constant 0 : i32
    %c0_i32_0 = arith.constant 0 : i32
    %c0_i32_1 = arith.constant 0 : i32
    return %c0_i32, %c0_i32_0 : i32, i32
  }
  func.func @transform_3(%arg0: i32) -> (i32, i32) {
    %c0_i32 = arith.constant 0 : i32
    %c0_i32_0 = arith.constant 0 : i32
    %c0_i32_1 = arith.constant 0 : i32
    return %c0_i32, %c0_i32_0 : i32, i32
  }
  func.func @transform_4(%arg0: i32) -> (i32, i32) {
    %c0_i32 = arith.constant 0 : i32
    %c0_i32_0 = arith.constant 0 : i32
    %c0_i32_1 = arith.constant 0 : i32
    return %c0_i32, %c0_i32_0 : i32, i32
  }
  func.func @transform_5(%arg0: i32) -> (i32, i32) {
    %c0_i32 = arith.constant 0 : i32
    %c0_i32_0 = arith.constant 0 : i32
    %c0_i32_1 = arith.constant 0 : i32
    return %c0_i32, %c0_i32_0 : i32, i32
  }
  func.func @transform_6(%arg0: i32) -> (i32, i32) {
    %c0_i32 = arith.constant 0 : i32
    %c0_i32_0 = arith.constant 0 : i32
    %c0_i32_1 = arith.constant 0 : i32
    return %c0_i32, %c0_i32_0 : i32, i32
  }
  func.func @transform_7(%arg0: i32) -> (i32, i32) {
    %c0_i32 = arith.constant 0 : i32
    %c0_i32_0 = arith.constant 0 : i32
    %c0_i32_1 = arith.constant 0 : i32
    return %c0_i32, %c0_i32_0 : i32, i32
  }
  func.func @transform_8(%arg0: i32) -> (i32, i32) {
    %c0_i32 = arith.constant 0 : i32
    %c0_i32_0 = arith.constant 0 : i32
    %c0_i32_1 = arith.constant 0 : i32
    return %c0_i32, %c0_i32_0 : i32, i32
  }
  func.func @transform_9(%arg0: i32) -> (i32, i32) {
    %c0_i32 = arith.constant 0 : i32
    %c0_i32_0 = arith.constant 0 : i32
    return %arg0, %c0_i32 : i32, i32
  }
}

</mosaic_0001>

<llo_original>
// kernel: tpu_custom_call.1
$region0: #{tpu_custom_call.1}
  #allocation0 [shape = 'u32[]', space=smem, size = 0x4, offset = 0x4, fixed_abs, tag = 'smem constant byte address 0x4 - core index']
  #allocation1 [shape = 'u32[144,128]{1,0:T(1,128)}', space=vmem, size = 0x12000, scoped, tag = 'internal scratch']
  #allocation2 [shape = 'f32[1,1]{1,0:T(1,128)S(1)}', space=vmem, size = 0x200, scoped, tag = 'scoped memory for tpu_custom_call.1']
  %s0 = inlined_call_operand.vmem [shape: f32[2,8], index: 0, kind: input, shape index: {}]
  %s1 = inlined_call_operand.hbm [shape: f32[2,4], index: 1, kind: input, shape index: {}]
  %s2 = inlined_call_operand.vmem [shape: f32[8,32], index: 2, kind: input, shape index: {}]
  %s3 = inlined_call_operand.vmem [shape: f32[4,32], index: 3, kind: input, shape index: {}]
  %s4 = inlined_call_operand.vmem [shape: f32[1,32], index: 4, kind: input, shape index: {}]
  %s5 = inlined_call_operand.hbm [shape: f32[32,32], index: 5, kind: input, shape index: {}]
  %s6 = inlined_call_operand.vmem [shape: f32[1,32], index: 6, kind: input, shape index: {}]
  %s7 = inlined_call_operand.vmem [shape: f32[1,32], index: 7, kind: input, shape index: {}]
  %s8 = inlined_call_operand.<no memory space> [shape: f32[1,1], index: 8, kind: input, shape index: {}]
  %s9 = inlined_call_operand.vmem [shape: f32[2,1], index: 9, kind: output, shape index: {}]
  %s10 = sld [smem:[#allocation0]]
  $region54: #{tpu_custom_call.1} parent=0
    _
  %s12 = ssub.s32 1, %s10
  %s13 = scalar_select 0, %s12, %s10
  %v14 = vstv %s8
  %15 = vst [vmem:[#allocation2] sm:$0x1] %v14
  $region1: #{tpu_custom_call.1} parent=0
    #allocation3 [shape = 'u8[1024]{0}', space=vmem, size = 0x400, scoped, tag = 'input window, operand 1, single buffered']
    #allocation4 [shape = 's32[1]{0}', space=sflag, size = 0x4, scoped, tag = 'scoped memory for tpu_custom_call.1']
    #allocation5 [shape = 'u8[16384]{0}', space=vmem, size = 0x4000, scoped, tag = 'input window, operand 5, single buffered']
    #allocation6 [shape = 's32[1]{0}', space=sflag, size = 0x4, scoped, tag = 'scoped memory for tpu_custom_call.1']
    %16 = vsyncpa [#allocation4], 0
    %17 = vsyncpa [#allocation6], 0
    // Predicated region
    $region2: #{tpu_custom_call.1} parent=1 // pred_check
      _
    $region3: #{tpu_custom_call.1} parent=1 // pred_check_branch
      %19 = sbr.rel (0) target = $region5
    $region4: #{tpu_custom_call.1} parent=1 // pred_region
      _
    $region5: #{tpu_custom_call.1} parent=1 // pred_fallthru
      _
    // Predicated region
    $region6: #{tpu_custom_call.1} parent=1 // pred_check
      _
    $region7: #{tpu_custom_call.1} parent=1 // pred_check_branch
      %21 = sbr.rel (0) target = $region9
    $region8: #{tpu_custom_call.1} parent=1 // pred_region
      %s23 = ssub.s32 32, 32
      %24 = vsyncadd [#allocation4], %s23
      %s26 = sshll.u32 [#allocation3], 4
      %s27 = int_to_ptr.vmem [resolvable:$true] %s26
      %29 = dma.hbm_to_vmem [thread:$0]  %s1, 32, %s27, [#allocation4]
    $region9: #{tpu_custom_call.1} parent=1 // pred_fallthru
      _
    // Predicated region
    $region10: #{tpu_custom_call.1} parent=1 // pred_check
      _
    $region11: #{tpu_custom_call.1} parent=1 // pred_check_branch
      %31 = sbr.rel (0) target = $region13
    $region12: #{tpu_custom_call.1} parent=1 // pred_region
      _
    $region13: #{tpu_custom_call.1} parent=1 // pred_fallthru
      _
    // Predicated region
    $region14: #{tpu_custom_call.1} parent=1 // pred_check
      _
    $region15: #{tpu_custom_call.1} parent=1 // pred_check_branch
      %33 = sbr.rel (0) target = $region17
    $region16: #{tpu_custom_call.1} parent=1 // pred_region
      _
    $region17: #{tpu_custom_call.1} parent=1 // pred_fallthru
      _
    // Predicated region
    $region18: #{tpu_custom_call.1} parent=1 // pred_check
      _
    $region19: #{tpu_custom_call.1} parent=1 // pred_check_branch
      %35 = sbr.rel (0) target = $region21
    $region20: #{tpu_custom_call.1} parent=1 // pred_region
      _
    $region21: #{tpu_custom_call.1} parent=1 // pred_fallthru
      _
    // Predicated region
    $region22: #{tpu_custom_call.1} parent=1 // pred_check
      _
    $region23: #{tpu_custom_call.1} parent=1 // pred_check_branch
      %37 = sbr.rel (0) target = $region25
    $region24: #{tpu_custom_call.1} parent=1 // pred_region
      %s39 = ssub.s32 512, 512
      %40 = vsyncadd [#allocation6], %s39
      %s41 = sshll.u32 [#allocation5], 4
      %s42 = int_to_ptr.vmem [resolvable:$true] %s41
      %47 = dma.hbm_to_vmem [thread:$0]  %s5, 512, %s42, [#allocation6], 128, 128, 8
    $region25: #{tpu_custom_call.1} parent=1 // pred_fallthru
      _
    // Predicated region
    $region26: #{tpu_custom_call.1} parent=1 // pred_check
      _
    $region27: #{tpu_custom_call.1} parent=1 // pred_check_branch
      %49 = sbr.rel (0) target = $region29
    $region28: #{tpu_custom_call.1} parent=1 // pred_region
      _
    $region29: #{tpu_custom_call.1} parent=1 // pred_fallthru
      _
    // Predicated region
    $region30: #{tpu_custom_call.1} parent=1 // pred_check
      _
    $region31: #{tpu_custom_call.1} parent=1 // pred_check_branch
      %51 = sbr.rel (0) target = $region33
    $region32: #{tpu_custom_call.1} parent=1 // pred_region
      _
    $region33: #{tpu_custom_call.1} parent=1 // pred_fallthru
      _
    // Predicated region
    $region34: #{tpu_custom_call.1} parent=1 // pred_check
      _
    $region35: #{tpu_custom_call.1} parent=1 // pred_check_branch
      %53 = sbr.rel (0) target = $region37
    $region36: #{tpu_custom_call.1} parent=1 // pred_region
      _
    $region37: #{tpu_custom_call.1} parent=1 // pred_fallthru
      _
    // Predicated region
    $region38: #{tpu_custom_call.1} parent=1 // pred_check
      _
    $region39: #{tpu_custom_call.1} parent=1 // pred_check_branch
      %55 = sbr.rel (0) target = $region41
    $region40: #{tpu_custom_call.1} parent=1 // pred_region
      %56 = dma.done [#allocation4], 32
    $region41: #{tpu_custom_call.1} parent=1 // pred_fallthru
      _
    // Predicated region
    $region42: #{tpu_custom_call.1} parent=1 // pred_check
      _
    $region43: #{tpu_custom_call.1} parent=1 // pred_check_branch
      %58 = sbr.rel (0) target = $region45
    $region44: #{tpu_custom_call.1} parent=1 // pred_region
      %59 = dma.done [#allocation6], 512
    $region45: #{tpu_custom_call.1} parent=1 // pred_fallthru
      _
    %v60 = vld [vmem:[%s0] sm:$0x3]
    %v61 = vld [vmem:[#allocation3] sm:$0x3]
    %v62 = vld [vmem:[%s2] sm:$0xff]
    %v63 = vld [vmem:[%s3] sm:$0xf]
    %vm64 = vcmask 31744
    %v66 = vsel %vm64, %v61, 0
    %vm68 = vcmask 1043456
    %v70 = vsel %vm68, %v63, 0
    %72 = vmatprep.subr.mxu0 0.0
    %73 = vmatpush1.msra.mxu0 %v70
    %74 = vmatprep.subr.mxu0 0.0
    %75 = vmatpush1.msra.mxu0 0.0
    %76 = vmatprep.subr.mxu0 0.0
    %77 = vmatpush1.msra.mxu0 0.0
    %78 = vmatprep.subr.mxu0 0.0
    %79 = vmatpush1.msra.mxu0 0.0
    %80 = vmatprep.subr.mxu0 0.0
    %81 = vmatpush1.msra.mxu0 0.0
    %82 = vmatprep.subr.mxu0 0.0
    %83 = vmatpush1.msra.mxu0 0.0
    %84 = vmatprep.subr.mxu0 0.0
    %85 = vmatpush1.msra.mxu0 0.0
    %86 = vmatprep.subr.mxu0 0.0
    %87 = vmatpush1.msra.mxu0 0.0
    %88 = vmatprep.subr.mxu0 0.0
    %89 = vmatpush1.msra.mxu0 0.0
    %90 = vmatprep.subr.mxu0 0.0
    %91 = vmatpush1.msra.mxu0 0.0
    %92 = vmatprep.subr.mxu0 0.0
    %93 = vmatpush1.msra.mxu0 0.0
    %94 = vmatprep.subr.mxu0 0.0
    %95 = vmatpush1.msra.mxu0 0.0
    %96 = vmatprep.subr.mxu0 0.0
    %97 = vmatpush1.msra.mxu0 0.0
    %98 = vmatprep.subr.mxu0 0.0
    %99 = vmatpush1.msra.mxu0 0.0
    %100 = vmatprep.subr.mxu0 0.0
    %101 = vmatpush1.msra.mxu0 0.0
    %102 = vmatprep.subr.mxu0 0.0
    %103 = vmatpush1.msra.mxu0 0.0
    %104 = vmatprep.subr.mxu0 0.0
    %105 = vmatpush1.msra.mxu0 0.0
    %106 = vmatprep.subr.mxu0 0.0
    %107 = vmatpush1.msra.mxu0 0.0
    %108 = vmatprep.subr.mxu0 0.0
    %109 = vmatpush1.msra.mxu0 0.0
    %110 = vmatprep.subr.mxu0 0.0
    %111 = vmatpush1.msra.mxu0 0.0
    %112 = vmatprep.subr.mxu0 0.0
    %113 = vmatpush1.msra.mxu0 0.0
    %114 = vmatprep.subr.mxu0 0.0
    %115 = vmatpush1.msra.mxu0 0.0
    %116 = vmatprep.subr.mxu0 0.0
    %117 = vmatpush1.msra.mxu0 0.0
    %118 = vmatprep.subr.mxu0 0.0
    %119 = vmatpush1.msra.mxu0 0.0
    %120 = vmatprep.subr.mxu0 0.0
    %121 = vmatpush1.msra.mxu0 0.0
    %122 = vmatprep.subr.mxu0 0.0
    %123 = vmatpush1.msra.mxu0 0.0
    %124 = vmatprep.subr.mxu0 0.0
    %125 = vmatpush1.msra.mxu0 0.0
    %126 = vmatprep.subr.mxu0 0.0
    %127 = vmatpush1.msra.mxu0 0.0
    %128 = vmatprep.subr.mxu0 0.0
    %129 = vmatpush1.msra.mxu0 0.0
    %130 = vmatprep.subr.mxu0 0.0
    %131 = vmatpush1.msra.mxu0 0.0
    %132 = vmatprep.subr.mxu0 0.0
    %133 = vmatpush1.msra.mxu0 0.0
    %134 = vmatprep.subr.mxu0 0.0
    %135 = vmatpush1.msra.mxu0 0.0
    %136 = vmatprep.mubr.f32.mxu0 0.0
    %137 = vmatmul.mubr.f32.gmra.mrb[0].mxu0 %v66
    %v138 = vpop.f32.mrb[0].mxu0
    %v139 = vadd.f32 0.0, %v138
    %v140 = vpop.f32.mrb[0].mxu0
    %141 = vdwg.mxu0
    %vm142 = vcmask 64512
    %v144 = vsel %vm142, %v60, 0
    %146 = vmatprep.subr.mxu0 0.0
    %147 = vmatpush1.msra.mxu0 %v62
    %148 = vmatprep.subr.mxu0 0.0
    %149 = vmatpush1.msra.mxu0 0.0
    %150 = vmatprep.subr.mxu0 0.0
    %151 = vmatpush1.msra.mxu0 0.0
    %152 = vmatprep.subr.mxu0 0.0
    %153 = vmatpush1.msra.mxu0 0.0
    %154 = vmatprep.subr.mxu0 0.0
    %155 = vmatpush1.msra.mxu0 0.0
    %156 = vmatprep.subr.mxu0 0.0
    %157 = vmatpush1.msra.mxu0 0.0
    %158 = vmatprep.subr.mxu0 0.0
    %159 = vmatpush1.msra.mxu0 0.0
    %160 = vmatprep.subr.mxu0 0.0
    %161 = vmatpush1.msra.mxu0 0.0
    %162 = vmatprep.subr.mxu0 0.0
    %163 = vmatpush1.msra.mxu0 0.0
    %164 = vmatprep.subr.mxu0 0.0
    %165 = vmatpush1.msra.mxu0 0.0
    %166 = vmatprep.subr.mxu0 0.0
    %167 = vmatpush1.msra.mxu0 0.0
    %168 = vmatprep.subr.mxu0 0.0
    %169 = vmatpush1.msra.mxu0 0.0
    %170 = vmatprep.subr.mxu0 0.0
    %171 = vmatpush1.msra.mxu0 0.0
    %172 = vmatprep.subr.mxu0 0.0
    %173 = vmatpush1.msra.mxu0 0.0
    %174 = vmatprep.subr.mxu0 0.0
    %175 = vmatpush1.msra.mxu0 0.0
    %176 = vmatprep.subr.mxu0 0.0
    %177 = vmatpush1.msra.mxu0 0.0
    %178 = vmatprep.subr.mxu0 0.0
    %179 = vmatpush1.msra.mxu0 0.0
    %180 = vmatprep.subr.mxu0 0.0
    %181 = vmatpush1.msra.mxu0 0.0
    %182 = vmatprep.subr.mxu0 0.0
    %183 = vmatpush1.msra.mxu0 0.0
    %184 = vmatprep.subr.mxu0 0.0
    %185 = vmatpush1.msra.mxu0 0.0
    %186 = vmatprep.subr.mxu0 0.0
    %187 = vmatpush1.msra.mxu0 0.0
    %188 = vmatprep.subr.mxu0 0.0
    %189 = vmatpush1.msra.mxu0 0.0
    %190 = vmatprep.subr.mxu0 0.0
    %191 = vmatpush1.msra.mxu0 0.0
    %192 = vmatprep.subr.mxu0 0.0
    %193 = vmatpush1.msra.mxu0 0.0
    %194 = vmatprep.subr.mxu0 0.0
    %195 = vmatpush1.msra.mxu0 0.0
    %196 = vmatprep.subr.mxu0 0.0
    %197 = vmatpush1.msra.mxu0 0.0
    %198 = vmatprep.subr.mxu0 0.0
    %199 = vmatpush1.msra.mxu0 0.0
    %200 = vmatprep.subr.mxu0 0.0
    %201 = vmatpush1.msra.mxu0 0.0
    %202 = vmatprep.subr.mxu0 0.0
    %203 = vmatpush1.msra.mxu0 0.0
    %204 = vmatprep.subr.mxu0 0.0
    %205 = vmatpush1.msra.mxu0 0.0
    %206 = vmatprep.subr.mxu0 0.0
    %207 = vmatpush1.msra.mxu0 0.0
    %208 = vmatprep.subr.mxu0 0.0
    %209 = vmatpush1.msra.mxu0 0.0
    %210 = vmatprep.mubr.f32.mxu0 0.0
    %211 = vmatmul.mubr.f32.gmra.mrb[0].mxu0 %v144
    %v212 = vpop.f32.mrb[0].mxu0
    %v213 = vadd.f32 %v139, %v212
    %v214 = vpop.f32.mrb[0].mxu0
    %215 = vdwg.mxu0
    %v216 = vld [vmem:[%s4] sm:$0x1]
    %v218 = vlaneseq
    %v219 = vshrl.u32 %v218, 7
    %v220 = vsub.s32 0, %v219
    %v221 = vrot.slane %v216, %v220
    %v223 = vadd.f32 %v213, %v221
    %v224 = vmax.f32 %v223, 0.0
    %v225 = vld [vmem:[#allocation5] sm:$0xff]
    %v226 = vld [vmem:[#allocation5 + $0x8] sm:$0xff]
    %v227 = vld [vmem:[#allocation5 + $0x10] sm:$0xff]
    %v228 = vld [vmem:[#allocation5 + $0x18] sm:$0xff]
    %v229 = vld [vmem:[%s6] sm:$0x1]
    %v231 = vlaneseq
    %v232 = vshrl.u32 %v231, 7
    %v233 = vsub.s32 0, %v232
    %v234 = vrot.slane %v229, %v233
    %vm236 = vcmask 261120
    %v238 = vsel %vm236, %v224, 0
    %240 = vmatprep.subr.mxu0 0.0
    %241 = vmatpush1.msra.mxu0 %v225
    %242 = vmatprep.subr.mxu0 0.0
    %243 = vmatpush1.msra.mxu0 %v226
    %244 = vmatprep.subr.mxu0 0.0
    %245 = vmatpush1.msra.mxu0 %v227
    %246 = vmatprep.subr.mxu0 0.0
    %247 = vmatpush1.msra.mxu0 %v228
    %248 = vmatprep.subr.mxu0 0.0
    %249 = vmatpush1.msra.mxu0 0.0
    %250 = vmatprep.subr.mxu0 0.0
    %251 = vmatpush1.msra.mxu0 0.0
    %252 = vmatprep.subr.mxu0 0.0
    %253 = vmatpush1.msra.mxu0 0.0
    %254 = vmatprep.subr.mxu0 0.0
    %255 = vmatpush1.msra.mxu0 0.0
    %256 = vmatprep.subr.mxu0 0.0
    %257 = vmatpush1.msra.mxu0 0.0
    %258 = vmatprep.subr.mxu0 0.0
    %259 = vmatpush1.msra.mxu0 0.0
    %260 = vmatprep.subr.mxu0 0.0
    %261 = vmatpush1.msra.mxu0 0.0
    %262 = vmatprep.subr.mxu0 0.0
    %263 = vmatpush1.msra.mxu0 0.0
    %264 = vmatprep.subr.mxu0 0.0
    %265 = vmatpush1.msra.mxu0 0.0
    %266 = vmatprep.subr.mxu0 0.0
    %267 = vmatpush1.msra.mxu0 0.0
    %268 = vmatprep.subr.mxu0 0.0
    %269 = vmatpush1.msra.mxu0 0.0
    %270 = vmatprep.subr.mxu0 0.0
    %271 = vmatpush1.msra.mxu0 0.0
    %272 = vmatprep.subr.mxu0 0.0
    %273 = vmatpush1.msra.mxu0 0.0
    %274 = vmatprep.subr.mxu0 0.0
    %275 = vmatpush1.msra.mxu0 0.0
    %276 = vmatprep.subr.mxu0 0.0
    %277 = vmatpush1.msra.mxu0 0.0
    %278 = vmatprep.subr.mxu0 0.0
    %279 = vmatpush1.msra.mxu0 0.0
    %280 = vmatprep.subr.mxu0 0.0
    %281 = vmatpush1.msra.mxu0 0.0
    %282 = vmatprep.subr.mxu0 0.0
    %283 = vmatpush1.msra.mxu0 0.0
    %284 = vmatprep.subr.mxu0 0.0
    %285 = vmatpush1.msra.mxu0 0.0
    %286 = vmatprep.subr.mxu0 0.0
    %287 = vmatpush1.msra.mxu0 0.0
    %288 = vmatprep.subr.mxu0 0.0
    %289 = vmatpush1.msra.mxu0 0.0
    %290 = vmatprep.subr.mxu0 0.0
    %291 = vmatpush1.msra.mxu0 0.0
    %292 = vmatprep.subr.mxu0 0.0
    %293 = vmatpush1.msra.mxu0 0.0
    %294 = vmatprep.subr.mxu0 0.0
    %295 = vmatpush1.msra.mxu0 0.0
    %296 = vmatprep.subr.mxu0 0.0
    %297 = vmatpush1.msra.mxu0 0.0
    %298 = vmatprep.subr.mxu0 0.0
    %299 = vmatpush1.msra.mxu0 0.0
    %300 = vmatprep.subr.mxu0 0.0
    %301 = vmatpush1.msra.mxu0 0.0
    %302 = vmatprep.subr.mxu0 0.0
    %303 = vmatpush1.msra.mxu0 0.0
    %304 = vmatprep.mubr.f32.mxu0 0.0
    %305 = vmatmul.mubr.f32.gmra.mrb[0].mxu0 %v238
    %v306 = vpop.f32.mrb[0].mxu0
    %v307 = vadd.f32 %v234, %v306
    %v308 = vpop.f32.mrb[0].mxu0
    %309 = vdwg.mxu0
    %v310 = vmax.f32 %v307, 0.0
    %v311 = vld [vmem:[%s7] sm:$0x1]
    %v313 = vlaneseq
    %v314 = vshrl.u32 %v313, 7
    %v315 = vsub.s32 0, %v314
    %v316 = vrot.slane %v311, %v315
    %v318 = vmul.f32 %v310, %v316
    %vm319 = vcmask 254976
    %v320 = vsel %vm319, %v318, 0.0
    %321 = vadd.xlane.f32.xlu0 %v320
    %v322 = vpop.xlane.xlu0 %321
    %v323 = vld [vmem:[#allocation2] sm:$0x1]
    %v325 = vlaneseq
    %v326 = vshrl.u32 %v325, 7
    %v327 = vsub.s32 0, %v326
    %v328 = vrot.slane %v323, %v327
    %v330 = vadd.f32 %v322, %v328
    %vm331 = vcmask 1024
    %332 = vst.msk [vmem:[%s9] sm:$0x3] %vm331, %v330
    // Predicated region
    $region46: #{tpu_custom_call.1} parent=1 // pred_check
      _
    $region47: #{tpu_custom_call.1} parent=1 // pred_check_branch
      %334 = sbr.rel (0) target = $region49
    $region48: #{tpu_custom_call.1} parent=1 // pred_region
      _
    $region49: #{tpu_custom_call.1} parent=1 // pred_fallthru
      _
    // Predicated region
    $region50: #{tpu_custom_call.1} parent=1 // pred_check
      _
    $region51: #{tpu_custom_call.1} parent=1 // pred_check_branch
      %336 = sbr.rel (0) target = $region53
    $region52: #{tpu_custom_call.1} parent=1 // pred_region
      _
    $region53: #{tpu_custom_call.1} parent=1 // pred_fallthru
      _
    %337 = vsyncpa [#allocation4], 1
    %338 = vsyncpa [#allocation6], 1

</llo_original>
